<compile_context>
chip_gen: v7x
topology: tpu7x:2x2x1
jax: 0.10.0
libtpu: 0.0.40
codegen_flags: <defaults>
</compile_context>

<pallas_src>
import jax
import jax.numpy as jnp
from jax import lax
from jax.experimental import pallas as pl
from jax.experimental.pallas import tpu as pltpu
from functools import partial


def _sdpa_kernel(q_ref, k_ref, v_ref, out_ref, attn_ref, *, inv_temperature):
    # Batch dim is squeezed by the BlockSpec: refs are (TQ, D), (Lk, D), (Lk, Dv), ...
    # Fold 1/temperature into q, then cast both matmul operands to bf16 so the MXU runs at
    # its native bf16 rate; accumulation stays f32 via preferred_element_type.
    q = (q_ref[...] * inv_temperature).astype(jnp.bfloat16)   # (TQ, D)
    k = k_ref[...].astype(jnp.bfloat16)                        # (Lk, D)

    # scores = (q / temperature) @ k^T, contracting D on both operands (no XLU transpose).
    s = lax.dot_general(
        q, k,
        dimension_numbers=(((1,), (1,)), ((), ())),
        preferred_element_type=jnp.float32,
    )                                                          # (TQ, Lk) f32

    # numerically-stable softmax over the key axis (torch Softmax(dim=2))
    m = jnp.max(s, axis=-1, keepdims=True)
    p = jnp.exp(s - m)
    denom = jnp.sum(p, axis=-1, keepdims=True)
    # EUP vrcp; rows sum to 1 only approximately (error << test tolerance) -- documented.
    attn = p * pl.reciprocal(denom, approx=True)

    # output = attn @ v on the MXU, bf16 operands, f32 accumulate.
    out = jnp.dot(attn.astype(jnp.bfloat16), v_ref[...].astype(jnp.bfloat16),
                  preferred_element_type=jnp.float32)          # (TQ, Dv)

    attn_ref[...] = attn.astype(attn_ref.dtype)
    out_ref[...] = out.astype(out_ref.dtype)


def _round_up(x, m):
    return (x + m - 1) // m * m


def _tpu_generation():
    try:
        kind = jax.devices()[0].device_kind.lower()
    except Exception:
        return "unknown"
    if "v5" in kind:
        return "v5"
    if "v6" in kind:
        return "v6"
    if "7" in kind:
        return "v7"
    return "unknown"


def _vmem_estimate(tq, lk, d, dv, kv_buffers, attn_itemsize):
    """Rough VMEM footprint (bytes) of one grid step for the resident-Lk design."""
    f32 = 4
    kv = kv_buffers * (lk * d + lk * dv) * f32     # resident k/v blocks (1 or 2 buffers)
    q_io = 2 * tq * d * f32                        # double-buffered q tile
    out_io = 2 * tq * dv * f32                     # double-buffered out tile
    attn_io = 2 * tq * lk * attn_itemsize          # double-buffered attn tile
    interm = 3 * tq * lk * f32                     # s / p / attn intermediates
    return kv + q_io + out_io + attn_io + interm


def scaled_dot_product_attention(q, k, v, temperature, *, tq=None, attn_dtype=None):
    B, Lq, D = q.shape
    _, Lk, Dv = v.shape
    assert k.shape == (B, Lk, D)

    # attn writeback dominates HBM traffic for large Lk; pass attn_dtype=jnp.bfloat16 to
    # halve it. Default keeps the module's dtype.
    attn_dtype = q.dtype if attn_dtype is None else jnp.dtype(attn_dtype)
    attn_itemsize = jnp.dtype(attn_dtype).itemsize

    # Generation-aware tiling / VMEM policy.
    gen = _tpu_generation()
    if gen == "v7":
        vmem_budget = 48 * 1024 * 1024   # 64 MiB physical -> leave compiler headroom
        kv_buffers = 1                   # pl.Buffered(1): k/v block index changes only with batch
        preferred_tq = 256               # 2x256^2 MXU
    elif gen == "v6":
        vmem_budget = 64 * 1024 * 1024   # 128 MiB physical
        kv_buffers = 2
        preferred_tq = 256               # 2x256^2 MXU
    elif gen == "v5":
        vmem_budget = 64 * 1024 * 1024   # 128 MiB physical
        kv_buffers = 2
        preferred_tq = 128               # 4x128^2 MXU
    else:
        vmem_budget = 48 * 1024 * 1024
        kv_buffers = 2
        preferred_tq = 128

    if tq is None:
        tq = preferred_tq
        if _vmem_estimate(tq, Lk, D, Dv, kv_buffers, attn_itemsize) > vmem_budget:
            tq = 128
        # TODO(synk): if even tq=128 does not fit (very long Lk), dispatch to a flash-style
        #             Lk-tiled online-softmax kernel instead of the resident-Lk design.

    # Query-tile selection; padded query rows produce finite values and are sliced off after.
    if Lq <= tq:
        tq_eff = max(8, _round_up(Lq, 8))   # multiple of 8 -> unmasked sublane stores
    else:
        tq_eff = tq
    lq_pad = _round_up(Lq, tq_eff)
    if lq_pad != Lq:
        q = jnp.pad(q, ((0, 0), (0, lq_pad - Lq), (0, 0)))

    kernel = partial(_sdpa_kernel, inv_temperature=1.0 / float(temperature))

    itemsize = jnp.dtype(q.dtype).itemsize
    cost = pl.CostEstimate(
        flops=2 * B * lq_pad * Lk * (D + Dv),
        transcendentals=B * lq_pad * Lk,
        bytes_accessed=(B * lq_pad * D + B * Lk * D + B * Lk * Dv
                        + B * lq_pad * Dv) * itemsize
                       + B * lq_pad * Lk * attn_itemsize,
    )

    # k/v: indexed by batch only -> stay VMEM-resident across the Lq tiles.
    if kv_buffers == 1:
        k_spec = pl.BlockSpec((pl.Squeezed(), Lk, D), lambda b, i: (b, 0, 0),
                              pipeline_mode=pl.Buffered(1))
        v_spec = pl.BlockSpec((pl.Squeezed(), Lk, Dv), lambda b, i: (b, 0, 0),
                              pipeline_mode=pl.Buffered(1))
    else:
        k_spec = pl.BlockSpec((pl.Squeezed(), Lk, D), lambda b, i: (b, 0, 0))
        v_spec = pl.BlockSpec((pl.Squeezed(), Lk, Dv), lambda b, i: (b, 0, 0))

    # Grid (B, Lq_tiles), both axes "parallel": on v7x megacore the B*Lq_tiles product is
    # split across the 2 TensorCores; with B>=2 or multiple Lq tiles both cores stay busy.
    out, attn = pl.pallas_call(
        kernel,
        out_shape=(
            jax.ShapeDtypeStruct((B, lq_pad, Dv), q.dtype),
            jax.ShapeDtypeStruct((B, lq_pad, Lk), attn_dtype),
        ),
        grid_spec=pltpu.PrefetchScalarGridSpec(
            num_scalar_prefetch=0,
            grid=(B, lq_pad // tq_eff),
            in_specs=[
                # q: tiled over (batch, query-tile)
                pl.BlockSpec((pl.Squeezed(), tq_eff, D), lambda b, i: (b, i, 0)),
                k_spec,
                v_spec,
            ],
            out_specs=[
                pl.BlockSpec((pl.Squeezed(), tq_eff, Dv), lambda b, i: (b, i, 0)),
                pl.BlockSpec((pl.Squeezed(), tq_eff, Lk), lambda b, i: (b, i, 0)),
            ],
        ),
        compiler_params=pltpu.CompilerParams(
            dimension_semantics=("parallel", "parallel"),
            vmem_limit_bytes=vmem_budget,
        ),
        cost_estimate=cost,
    )(q, k, v)

    if lq_pad != Lq:
        out = out[:, :Lq, :]
        attn = attn[:, :Lq, :]
    return out, attn


def _reference(q, k, v, temperature):
    s = jnp.einsum("bqd,bkd->bqk", q, k) / temperature
    attn = jax.nn.softmax(s, axis=2)
    return jnp.einsum("bqk,bkd->bqd", attn, v), attn


if __name__ == "__main__":
    key = jax.random.PRNGKey(0)
    kq, kk, kv = jax.random.split(key, 3)

    # Small but lane-dense / MXU-friendly shapes (Lk and Dv multiples of 128).
    B, Lq, Lk, D, Dv = 2, 256, 128, 64, 128
    temperature = float(D) ** 0.5

    q = jax.random.normal(kq, (B, Lq, D), dtype=jnp.float32)
    k = jax.random.normal(kk, (B, Lk, D), dtype=jnp.float32)
    v = jax.random.normal(kv, (B, Lk, Dv), dtype=jnp.float32)

    out, attn = scaled_dot_product_attention(q, k, v, temperature)
    jax.block_until_ready((out, attn))

    out_ref, attn_ref = _reference(q, k, v, temperature)
    assert out.shape == out_ref.shape and attn.shape == attn_ref.shape
    # bf16 MXU operands + approx reciprocal -> slightly looser tolerance vs. the f32 reference.
    assert jnp.allclose(attn, attn_ref, atol=5e-3, rtol=2e-2)
    assert jnp.allclose(out, out_ref, atol=1e-2, rtol=2e-2)

    print("KERNEL_OK")
</pallas_src>

<mosaic_0001>
module attributes {stable_mosaic.version = 11 : i64} {
  func.func @_sdpa_kernel(%arg0: i32, %arg1: i32, %arg2: memref<1x128x64xf32, #tpu.memory_space<vmem>>, %arg3: memref<1x128x64xf32, #tpu.memory_space<vmem>>, %arg4: memref<1x128x128xf32, #tpu.memory_space<vmem>>, %arg5: memref<1x128x128xf32, #tpu.memory_space<vmem>>, %arg6: memref<1x128x128xf32, #tpu.memory_space<vmem>>) attributes {dimension_semantics = [#tpu.dimension_semantics<parallel>, #tpu.dimension_semantics<parallel>], iteration_bounds = array<i64: 2, 2>, scalar_prefetch = 0 : i64, scratch_operands = 0 : i64, tpu.core_type = #tpu.core_type<tc>, window_params = [{transform_indices = @transform_0, window_bounds = array<i64: 1, 128, 64>}, {transform_indices = @transform_1, window_bounds = array<i64: 1, 128, 64>}, {transform_indices = @transform_2, window_bounds = array<i64: 1, 128, 128>}, {transform_indices = @transform_3, window_bounds = array<i64: 1, 128, 128>}, {transform_indices = @transform_4, window_bounds = array<i64: 1, 128, 128>}]} {
    %c0 = arith.constant 0 : index
    %c0_0 = arith.constant 0 : index
    %c0_1 = arith.constant 0 : index
    %0 = vector.load %arg2[%c0, %c0_0, %c0_1] : memref<1x128x64xf32, #tpu.memory_space<vmem>>, vector<1x128x64xf32>
    %1 = vector.shape_cast %0 : vector<1x128x64xf32> to vector<128x64xf32>
    %cst = arith.constant 1.250000e-01 : f32
    %2 = vector.broadcast %cst : f32 to vector<128x64xf32>
    %3 = arith.mulf %1, %2 : vector<128x64xf32>
    %4 = arith.truncf %3 : vector<128x64xf32> to vector<128x64xbf16>
    %c0_2 = arith.constant 0 : index
    %c0_3 = arith.constant 0 : index
    %c0_4 = arith.constant 0 : index
    %5 = vector.load %arg3[%c0_2, %c0_3, %c0_4] : memref<1x128x64xf32, #tpu.memory_space<vmem>>, vector<1x128x64xf32>
    %6 = vector.shape_cast %5 : vector<1x128x64xf32> to vector<128x64xf32>
    %7 = arith.truncf %6 : vector<128x64xf32> to vector<128x64xbf16>
    %cst_5 = arith.constant dense<0.000000e+00> : vector<128x128xf32>
    %8 = tpu.matmul %4, %7, %cst_5 {dimension_numbers = #tpu.dot_dimension_numbers<[1], [1], [0], [0], [0, 0, 1, 0], [], []>} : vector<128x64xbf16>, vector<128x64xbf16>, vector<128x128xf32> -> vector<128x128xf32>
    %cst_6 = arith.constant dense<0xFF800000> : vector<128xf32>
    %9 = vector.multi_reduction <maximumf>, %8, %cst_6 [1] : vector<128x128xf32> to vector<128xf32>
    %10 = vector.shape_cast %9 : vector<128xf32> to vector<128x1xf32>
    %11 = vector.broadcast %10 : vector<128x1xf32> to vector<128x128xf32>
    %12 = arith.subf %8, %11 : vector<128x128xf32>
    %13 = math.exp %12 : vector<128x128xf32>
    %cst_7 = arith.constant dense<0.000000e+00> : vector<128xf32>
    %14 = vector.multi_reduction <add>, %13, %cst_7 [1] : vector<128x128xf32> to vector<128xf32>
    %15 = vector.shape_cast %14 : vector<128xf32> to vector<128x1xf32>
    %16 = tpu.reciprocal %15 {approx = true} : vector<128x1xf32> -> vector<128x1xf32>
    %17 = vector.broadcast %16 : vector<128x1xf32> to vector<128x128xf32>
    %18 = arith.mulf %13, %17 : vector<128x128xf32>
    %19 = arith.truncf %18 : vector<128x128xf32> to vector<128x128xbf16>
    %c0_8 = arith.constant 0 : index
    %c0_9 = arith.constant 0 : index
    %c0_10 = arith.constant 0 : index
    %20 = vector.load %arg4[%c0_8, %c0_9, %c0_10] : memref<1x128x128xf32, #tpu.memory_space<vmem>>, vector<1x128x128xf32>
    %21 = vector.shape_cast %20 : vector<1x128x128xf32> to vector<128x128xf32>
    %22 = arith.truncf %21 : vector<128x128xf32> to vector<128x128xbf16>
    %cst_11 = arith.constant dense<0.000000e+00> : vector<128x128xf32>
    %23 = tpu.matmul %19, %22, %cst_11 {dimension_numbers = #tpu.dot_dimension_numbers<[1], [0], [0], [1], [0, 0, 1, 1], [], []>} : vector<128x128xbf16>, vector<128x128xbf16>, vector<128x128xf32> -> vector<128x128xf32>
    %c0_12 = arith.constant 0 : index
    %c0_13 = arith.constant 0 : index
    %c0_14 = arith.constant 0 : index
    %24 = vector.load %arg6[%c0_12, %c0_13, %c0_14] : memref<1x128x128xf32, #tpu.memory_space<vmem>>, vector<1x128x128xf32>
    %25 = vector.shape_cast %24 : vector<1x128x128xf32> to vector<128x128xf32>
    %26 = vector.shape_cast %18 : vector<128x128xf32> to vector<1x128x128xf32>
    tpu.vector_store %arg6[%c0_12, %c0_13, %c0_14], %26 {strides = array<i32>} : memref<1x128x128xf32, #tpu.memory_space<vmem>>, vector<1x128x128xf32>,
    %c0_15 = arith.constant 0 : index
    %c0_16 = arith.constant 0 : index
    %c0_17 = arith.constant 0 : index
    %27 = vector.load %arg5[%c0_15, %c0_16, %c0_17] : memref<1x128x128xf32, #tpu.memory_space<vmem>>, vector<1x128x128xf32>
    %28 = vector.shape_cast %27 : vector<1x128x128xf32> to vector<128x128xf32>
    %29 = vector.shape_cast %23 : vector<128x128xf32> to vector<1x128x128xf32>
    tpu.vector_store %arg5[%c0_15, %c0_16, %c0_17], %29 {strides = array<i32>} : memref<1x128x128xf32, #tpu.memory_space<vmem>>, vector<1x128x128xf32>,
    return
  }
  func.func @transform_0(%arg0: i32, %arg1: i32) -> (i32, i32, i32) {
    %c0_i32 = arith.constant 0 : i32
    %c0_i32_0 = arith.constant 0 : i32
    return %arg0, %arg1, %c0_i32 : i32, i32, i32
  }
  func.func @transform_1(%arg0: i32, %arg1: i32) -> (i32, i32, i32) {
    %c0_i32 = arith.constant 0 : i32
    %c0_i32_0 = arith.constant 0 : i32
    %c0_i32_1 = arith.constant 0 : i32
    return %arg0, %c0_i32, %c0_i32_0 : i32, i32, i32
  }
  func.func @transform_2(%arg0: i32, %arg1: i32) -> (i32, i32, i32) {
    %c0_i32 = arith.constant 0 : i32
    %c0_i32_0 = arith.constant 0 : i32
    %c0_i32_1 = arith.constant 0 : i32
    return %arg0, %c0_i32, %c0_i32_0 : i32, i32, i32
  }
  func.func @transform_3(%arg0: i32, %arg1: i32) -> (i32, i32, i32) {
    %c0_i32 = arith.constant 0 : i32
    %c0_i32_0 = arith.constant 0 : i32
    return %arg0, %arg1, %c0_i32 : i32, i32, i32
  }
  func.func @transform_4(%arg0: i32, %arg1: i32) -> (i32, i32, i32) {
    %c0_i32 = arith.constant 0 : i32
    %c0_i32_0 = arith.constant 0 : i32
    return %arg0, %arg1, %c0_i32 : i32, i32, i32
  }
}

</mosaic_0001>

<llo_original>
// kernel: tpu_custom_call.1
$region0: #{tpu_custom_call.1}
  #allocation0 [shape = 'u32[]', space=smem, size = 0x4, offset = 0x4, fixed_abs, tag = 'smem constant byte address 0x4 - core index']
  #allocation1 [shape = 'u32[144,128]{1,0:T(1,128)}', space=vmem, size = 0x12000, scoped, tag = 'internal scratch']
  %s0 = inlined_call_operand.vmem [shape: f32[2,256,64], index: 0, kind: input, shape index: {}]
  %s1 = inlined_call_operand.vmem [shape: f32[2,128,64], index: 1, kind: input, shape index: {}]
  %s2 = inlined_call_operand.vmem [shape: f32[2,128,128], index: 2, kind: input, shape index: {}]
  %s3 = inlined_call_operand.hbm [shape: f32[2,256,128], index: 3, kind: output, shape index: {0}]
  %s4 = inlined_call_operand.hbm [shape: f32[2,256,128], index: 4, kind: output, shape index: {1}]
  %5 = xla_tuple %s3, %s4
  %s6 = sld [smem:[#allocation0]]
  $region53: #{tpu_custom_call.1} parent=0
    _
  %s8 = ssub.s32 1, %s6
  %s9 = scalar_select 0, %s8, %s6
  $region1: #{tpu_custom_call.1} parent=0
    #allocation2 [shape = 'u8[131072]{0}', space=vmem, size = 0x20000, scoped, tag = 'output window, operand 0']
    #allocation3 [shape = 's32[2]{0}', space=sflag, size = 0x8, scoped, tag = 'scoped memory for tpu_custom_call.1']
    #allocation4 [shape = 'u8[131072]{0}', space=vmem, size = 0x20000, scoped, tag = 'output window, operand 1']
    #allocation5 [shape = 's32[2]{0}', space=sflag, size = 0x8, scoped, tag = 'scoped memory for tpu_custom_call.1']
    %10 = vsyncpa [#allocation3], 0
    %s11 = scalar_lea.sflag [#allocation3], 1
    %12 = vsyncpa %s11, 0
    %13 = vsyncpa [#allocation5], 0
    %s14 = scalar_lea.sflag [#allocation5], 1
    %15 = vsyncpa %s14, 0
    loop: start=0, step=1, limit=6
    $region2: #{tpu_custom_call.1} parent=1 // loop_pre_header
      _
    $region3: #{tpu_custom_call.1} parent=1 // loop_header
      %s17 = sphi 0, %s21
      %p18 = scmp.ge.s32.totalorder %s17, 6
      %s24 = sphi 0, %s36
      %s25 = sphi 0, %s32
      %s26 = sphi 0, %s24
      %s27 = sphi 0, %s25
      %s28 = sphi 0, %s26
      %s29 = sphi 0, %s27
      %s41 = sphi 0, %s43
      %s44 = sphi 0, %s41
      %s45 = sphi 0, %s44
      %s61 = sphi 0, %s45
      %s67 = sphi 0, %s69
      %s70 = sphi 0, %s67
      %s71 = sphi 0, %s70
      %s87 = sphi 0, %s71
      %s93 = sphi 0, %s95
      %s96 = sphi 0, %s93
      %s97 = sphi 0, %s96
      %s113 = sphi 0, %s97
      %s121 = sphi 0, %s123
      %s124 = sphi 0, %s121
      %s125 = sphi 0, %s124
      %s141 = sphi 0, %s125
      %s149 = sphi 0, %s151
      %s152 = sphi 0, %s149
      %s153 = sphi 0, %s152
      %s169 = sphi 0, %s153
    $region4: #{tpu_custom_call.1} parent=1 // loop_header_branch
      %20 = sbr.rel (%p18) target = $region8
    $region5: #{tpu_custom_call.1} parent=1 // loop_body
      %s22 = ssub.s32 %s17, 1
      %s23 = ssub.s32 %s17, 2
      %s30 = sadd.s32 1, %s25
      %p31 = scmp.ge.s32.totalorder %s30, 2
      %s32 = scalar_select %p31, 0, %s30
      %s33 = sadd.s32 1, %s24
      %s34 = scalar_select %p31, %s33, %s24
      %p35 = scmp.ge.s32.totalorder %s34, 2
      %s36 = scalar_select %p35, 0, %s34
      %s37 = ssub.s32 %s24, %s36
      %s38 = ssub.s32 %s25, %s32
      %s39 = sor.u32 %s37, %s38
      %p40 = scmp.eq.s32.totalorder %s39, 0
      %s42 = sadd.s32 %s41, 1
      %s43 = scalar_select %p40, %s41, %s42
      %p46 = pneg %p40
      %p47 = scmp.eq.s32.totalorder %s17, 3
      %p48 = por %p46, %p47
      %p49 = scmp.ne.s32.totalorder %s41, %s44
      %p50 = scmp.eq.s32.totalorder %s17, 0
      %p51 = por %p49, %p50
      %p52 = scmp.ne.s32.totalorder %s41, %s44
      %p53 = scmp.eq.s32.totalorder %s22, 3
      %p54 = por %p52, %p53
      %p55 = scmp.ne.s32.totalorder %s44, %s45
      %p56 = scmp.eq.s32.totalorder %s22, 0
      %p57 = por %p55, %p56
      %p58 = scmp.ne.s32.totalorder %s44, %s45
      %p59 = scmp.eq.s32.totalorder %s23, 3
      %p60 = por %p58, %p59
      %p62 = scmp.ne.s32.totalorder %s45, %s61
      %p63 = scmp.eq.s32.totalorder %s23, 0
      %p64 = por %p62, %p63
      %s65 = ssub.s32 %s24, %s36
      %p66 = scmp.eq.s32.totalorder %s65, 0
      %s68 = sadd.s32 %s67, 1
      %s69 = scalar_select %p66, %s67, %s68
      %p72 = pneg %p66
      %p73 = scmp.eq.s32.totalorder %s17, 3
      %p74 = por %p72, %p73
      %p75 = scmp.ne.s32.totalorder %s67, %s70
      %p76 = scmp.eq.s32.totalorder %s17, 0
      %p77 = por %p75, %p76
      %p78 = scmp.ne.s32.totalorder %s67, %s70
      %p79 = scmp.eq.s32.totalorder %s22, 3
      %p80 = por %p78, %p79
      %p81 = scmp.ne.s32.totalorder %s70, %s71
      %p82 = scmp.eq.s32.totalorder %s22, 0
      %p83 = por %p81, %p82
      %p84 = scmp.ne.s32.totalorder %s70, %s71
      %p85 = scmp.eq.s32.totalorder %s23, 3
      %p86 = por %p84, %p85
      %p88 = scmp.ne.s32.totalorder %s71, %s87
      %p89 = scmp.eq.s32.totalorder %s23, 0
      %p90 = por %p88, %p89
      %s91 = ssub.s32 %s24, %s36
      %p92 = scmp.eq.s32.totalorder %s91, 0
      %s94 = sadd.s32 %s93, 1
      %s95 = scalar_select %p92, %s93, %s94
      %p98 = pneg %p92
      %p99 = scmp.eq.s32.totalorder %s17, 3
      %p100 = por %p98, %p99
      %p101 = scmp.ne.s32.totalorder %s93, %s96
      %p102 = scmp.eq.s32.totalorder %s17, 0
      %p103 = por %p101, %p102
      %p104 = scmp.ne.s32.totalorder %s93, %s96
      %p105 = scmp.eq.s32.totalorder %s22, 3
      %p106 = por %p104, %p105
      %p107 = scmp.ne.s32.totalorder %s96, %s97
      %p108 = scmp.eq.s32.totalorder %s22, 0
      %p109 = por %p107, %p108
      %p110 = scmp.ne.s32.totalorder %s96, %s97
      %p111 = scmp.eq.s32.totalorder %s23, 3
      %p112 = por %p110, %p111
      %p114 = scmp.ne.s32.totalorder %s97, %s113
      %p115 = scmp.eq.s32.totalorder %s23, 0
      %p116 = por %p114, %p115
      %s117 = ssub.s32 %s24, %s36
      %s118 = ssub.s32 %s25, %s32
      %s119 = sor.u32 %s117, %s118
      %p120 = scmp.eq.s32.totalorder %s119, 0
      %s122 = sadd.s32 %s121, 1
      %s123 = scalar_select %p120, %s121, %s122
      %p126 = pneg %p120
      %p127 = scmp.eq.s32.totalorder %s17, 3
      %p128 = por %p126, %p127
      %p129 = scmp.ne.s32.totalorder %s121, %s124
      %p130 = scmp.eq.s32.totalorder %s17, 0
      %p131 = por %p129, %p130
      %p132 = scmp.ne.s32.totalorder %s121, %s124
      %p133 = scmp.eq.s32.totalorder %s22, 3
      %p134 = por %p132, %p133
      %p135 = scmp.ne.s32.totalorder %s124, %s125
      %p136 = scmp.eq.s32.totalorder %s22, 0
      %p137 = por %p135, %p136
      %p138 = scmp.ne.s32.totalorder %s124, %s125
      %p139 = scmp.eq.s32.totalorder %s23, 3
      %p140 = por %p138, %p139
      %p142 = scmp.ne.s32.totalorder %s125, %s141
      %p143 = scmp.eq.s32.totalorder %s23, 0
      %p144 = por %p142, %p143
      %s145 = ssub.s32 %s24, %s36
      %s146 = ssub.s32 %s25, %s32
      %s147 = sor.u32 %s145, %s146
      %p148 = scmp.eq.s32.totalorder %s147, 0
      %s150 = sadd.s32 %s149, 1
      %s151 = scalar_select %p148, %s149, %s150
      %p154 = pneg %p148
      %p155 = scmp.eq.s32.totalorder %s17, 3
      %p156 = por %p154, %p155
      %p157 = scmp.ne.s32.totalorder %s149, %s152
      %p158 = scmp.eq.s32.totalorder %s17, 0
      %p159 = por %p157, %p158
      %p160 = scmp.ne.s32.totalorder %s149, %s152
      %p161 = scmp.eq.s32.totalorder %s22, 3
      %p162 = por %p160, %p161
      %p163 = scmp.ne.s32.totalorder %s152, %s153
      %p164 = scmp.eq.s32.totalorder %s22, 0
      %p165 = por %p163, %p164
      %p166 = scmp.ne.s32.totalorder %s152, %s153
      %p167 = scmp.eq.s32.totalorder %s23, 3
      %p168 = por %p166, %p167
      %p170 = scmp.ne.s32.totalorder %s153, %s169
      %p171 = scmp.eq.s32.totalorder %s23, 0
      %p172 = por %p170, %p171
      %p173 = scmp.le.s32.totalorder 1, %s17
      %p174 = scmp.lt.s32.totalorder %s17, 5
      %p175 = pnand %p173, %p174
      %p176 = pneg %p175
      // Predicated region
      $region9: #{tpu_custom_call.1} parent=5 // pred_check
        _
      $region10: #{tpu_custom_call.1} parent=5 // pred_check_branch
        %178 = sbr.rel (%p175) target = $region12
      $region11: #{tpu_custom_call.1} parent=5 // pred_region
        %s179 = ssub.s32 %s17, 1
      $region12: #{tpu_custom_call.1} parent=5 // pred_fallthru
        _
      %p180 = scmp.lt.s32.totalorder %s17, 4
      // Predicated region
      $region13: #{tpu_custom_call.1} parent=5 // pred_check
        %p181 = pneg %p180
      $region14: #{tpu_custom_call.1} parent=5 // pred_check_branch
        %183 = sbr.rel (%p181) target = $region16
      $region15: #{tpu_custom_call.1} parent=5 // pred_region
        // Predicated region
        $region17: #{tpu_custom_call.1} parent=15 // pred_check
          %p184 = pneg %p51
        $region18: #{tpu_custom_call.1} parent=15 // pred_check_branch
          %186 = sbr.rel (%p184) target = $region20
        $region19: #{tpu_custom_call.1} parent=15 // pred_region
          %s187 = smul.u32 16, %s25
          %p188 = scmp.lt.s32.totalorder %s24, 1
          %s189 = scalar_select %p188, %s24, 1
          %p190 = scmp.lt.s32.totalorder %s187, 31
          %s191 = scalar_select %p190, %s187, 31
          %s192 = smul.addr %s189, 32
          %s193 = sadd.s32 %s191, %s192
          %s194 = smul.addr %s193, 8
          %s195 = scalar_lea.vmem %s0, %s194
          %s196 = smul.u32 16, %s25
        $region20: #{tpu_custom_call.1} parent=15 // pred_fallthru
          _
        // Predicated region
        $region21: #{tpu_custom_call.1} parent=15 // pred_check
          %p197 = pneg %p77
        $region22: #{tpu_custom_call.1} parent=15 // pred_check_branch
          %199 = sbr.rel (%p197) target = $region24
        $region23: #{tpu_custom_call.1} parent=15 // pred_region
          %p200 = scmp.lt.s32.totalorder %s24, 1
          %s201 = scalar_select %p200, %s24, 1
          %s202 = smul.addr %s201, 16
          %s203 = smul.addr %s202, 8
          %s204 = scalar_lea.vmem %s1, %s203
        $region24: #{tpu_custom_call.1} parent=15 // pred_fallthru
          _
        // Predicated region
        $region25: #{tpu_custom_call.1} parent=15 // pred_check
          %p205 = pneg %p103
        $region26: #{tpu_custom_call.1} parent=15 // pred_check_branch
          %207 = sbr.rel (%p205) target = $region28
        $region27: #{tpu_custom_call.1} parent=15 // pred_region
          %p208 = scmp.lt.s32.totalorder %s24, 1
          %s209 = scalar_select %p208, %s24, 1
          %s210 = smul.addr %s209, 16
          %s211 = smul.addr %s210, 8
          %s212 = scalar_lea.vmem %s2, %s211
        $region28: #{tpu_custom_call.1} parent=15 // pred_fallthru
          _
      $region16: #{tpu_custom_call.1} parent=5 // pred_fallthru
        _
      %p213 = scmp.le.s32.totalorder 1, %s17
      %p214 = scmp.lt.s32.totalorder %s17, 5
      %p215 = pnand %p213, %p214
      %p216 = pneg %p215
      // Predicated region
      $region29: #{tpu_custom_call.1} parent=5 // pred_check
        _
      $region30: #{tpu_custom_call.1} parent=5 // pred_check_branch
        %218 = sbr.rel (%p215) target = $region32
      $region31: #{tpu_custom_call.1} parent=5 // pred_region
        %s219 = ssub.s32 %s17, 1
        %s220 = smul.u32 16, %s27
        %p221 = scmp.lt.s32.totalorder %s26, 1
        %s222 = scalar_select %p221, %s26, 1
        %p223 = scmp.lt.s32.totalorder %s220, 31
        %s224 = scalar_select %p223, %s220, 31
        %s225 = smul.addr %s222, 32
        %s226 = sadd.s32 %s224, %s225
        %s227 = smul.addr %s226, 8
        %s228 = scalar_lea.vmem %s0, %s227
        %p229 = pneg %p57
        %p230 = pneg %p54
        %p231 = scmp.lt.s32.totalorder %s26, 1
        %s232 = scalar_select %p231, %s26, 1
        %s233 = smul.addr %s232, 16
        %s234 = smul.addr %s233, 8
        %s235 = scalar_lea.vmem %s1, %s234
        %p236 = pneg %p83
        %p237 = pneg %p80
        %p238 = scmp.lt.s32.totalorder %s26, 1
        %s239 = scalar_select %p238, %s26, 1
        %s240 = smul.addr %s239, 16
        %s241 = smul.addr %s240, 8
        %s242 = scalar_lea.vmem %s2, %s241
        %p243 = pneg %p109
        %p244 = pneg %p106
        %p245 = pneg %p137
        %p246 = pneg %p134
        %s247 = sand.u32 %s124, 1
        %s248 = scalar_lea.sflag [#allocation3], %s247
        %s249 = sand.u32 %s124, 1
        %s250 = smul.addr %s249, 128
        %s251 = scalar_lea.vmem [#allocation2], %s250
        %p252 = pneg %p165
        %p253 = pneg %p162
        %s254 = sand.u32 %s152, 1
        %s255 = scalar_lea.sflag [#allocation5], %s254
        %s256 = sand.u32 %s152, 1
        %s257 = smul.addr %s256, 128
        %s258 = scalar_lea.vmem [#allocation4], %s257
        %s259 = smul.u32 16, %s27
        %p260 = scmp.lt.s32.totalorder %s26, 1
        %s261 = scalar_select %p260, %s26, 1
        %p262 = scmp.lt.s32.totalorder %s259, 31
        %s263 = scalar_select %p262, %s259, 31
        %s264 = smul.addr %s261, 32
        %s265 = sadd.s32 %s263, %s264
        %s266 = smul.addr %s265, 8
        %s267 = scalar_lea.vmem %s0, %s266
        %s268 = smul.u32 16, %s27
        %p269 = scmp.lt.s32.totalorder %s26, 1
        %s270 = scalar_select %p269, %s26, 1
        %s271 = smul.addr %s270, 16
        %s272 = smul.addr %s271, 8
        %s273 = scalar_lea.vmem %s1, %s272
        %p274 = scmp.lt.s32.totalorder %s26, 1
        %s275 = scalar_select %p274, %s26, 1
        %s276 = smul.addr %s275, 16
        %s277 = smul.addr %s276, 8
        %s278 = scalar_lea.vmem %s2, %s277
        %s279 = smul.u32 16, %s27
        %s280 = smul.u32 16, %s27
        %v282 = vld [vmem:[%s267] sm:$0xff]
        %v283 = vld [vmem:[%s267 + $0x8] sm:$0xff]
        %v284 = vld [vmem:[%s267 + $0x10] sm:$0xff]
        %v285 = vld [vmem:[%s267 + $0x18] sm:$0xff]
        %v286 = vld [vmem:[%s267 + $0x20] sm:$0xff]
        %v287 = vld [vmem:[%s267 + $0x28] sm:$0xff]
        %v288 = vld [vmem:[%s267 + $0x30] sm:$0xff]
        %v289 = vld [vmem:[%s267 + $0x38] sm:$0xff]
        %v290 = vld [vmem:[%s267 + $0x40] sm:$0xff]
        %v291 = vld [vmem:[%s267 + $0x48] sm:$0xff]
        %v292 = vld [vmem:[%s267 + $0x50] sm:$0xff]
        %v293 = vld [vmem:[%s267 + $0x58] sm:$0xff]
        %v294 = vld [vmem:[%s267 + $0x60] sm:$0xff]
        %v295 = vld [vmem:[%s267 + $0x68] sm:$0xff]
        %v296 = vld [vmem:[%s267 + $0x70] sm:$0xff]
        %v297 = vld [vmem:[%s267 + $0x78] sm:$0xff]
        %v298 = vmul.f32 %v282, 0.125
        %v299 = vmul.f32 %v283, 0.125
        %v300 = vmul.f32 %v284, 0.125
        %v301 = vmul.f32 %v285, 0.125
        %v302 = vmul.f32 %v286, 0.125
        %v303 = vmul.f32 %v287, 0.125
        %v304 = vmul.f32 %v288, 0.125
        %v305 = vmul.f32 %v289, 0.125
        %v306 = vmul.f32 %v290, 0.125
        %v307 = vmul.f32 %v291, 0.125
        %v308 = vmul.f32 %v292, 0.125
        %v309 = vmul.f32 %v293, 0.125
        %v310 = vmul.f32 %v294, 0.125
        %v311 = vmul.f32 %v295, 0.125
        %v312 = vmul.f32 %v296, 0.125
        %v313 = vmul.f32 %v297, 0.125
        %v314 = vpack.c.bf16 %v299, %v298
        %v315 = vpack.c.bf16 %v301, %v300
        %v316 = vpack.c.bf16 %v303, %v302
        %v317 = vpack.c.bf16 %v305, %v304
        %v318 = vpack.c.bf16 %v307, %v306
        %v319 = vpack.c.bf16 %v309, %v308
        %v320 = vpack.c.bf16 %v311, %v310
        %v321 = vpack.c.bf16 %v313, %v312
        %v322 = vld [vmem:[%s273] sm:$0xff]
        %v323 = vld [vmem:[%s273 + $0x8] sm:$0xff]
        %v324 = vld [vmem:[%s273 + $0x10] sm:$0xff]
        %v325 = vld [vmem:[%s273 + $0x18] sm:$0xff]
        %v326 = vld [vmem:[%s273 + $0x20] sm:$0xff]
        %v327 = vld [vmem:[%s273 + $0x28] sm:$0xff]
        %v328 = vld [vmem:[%s273 + $0x30] sm:$0xff]
        %v329 = vld [vmem:[%s273 + $0x38] sm:$0xff]
        %v330 = vld [vmem:[%s273 + $0x40] sm:$0xff]
        %v331 = vld [vmem:[%s273 + $0x48] sm:$0xff]
        %v332 = vld [vmem:[%s273 + $0x50] sm:$0xff]
        %v333 = vld [vmem:[%s273 + $0x58] sm:$0xff]
        %v334 = vld [vmem:[%s273 + $0x60] sm:$0xff]
        %v335 = vld [vmem:[%s273 + $0x68] sm:$0xff]
        %v336 = vld [vmem:[%s273 + $0x70] sm:$0xff]
        %v337 = vld [vmem:[%s273 + $0x78] sm:$0xff]
        %v338 = vpack.c.bf16 %v323, %v322
        %v339 = vpack.c.bf16 %v325, %v324
        %v340 = vpack.c.bf16 %v327, %v326
        %v341 = vpack.c.bf16 %v329, %v328
        %v342 = vpack.c.bf16 %v331, %v330
        %v343 = vpack.c.bf16 %v333, %v332
        %v344 = vpack.c.bf16 %v335, %v334
        %v345 = vpack.c.bf16 %v337, %v336
        %vm346 = vcmask 523264
        %v348 = vsel %vm346, %v314, 0
        %v351 = vsel %vm346, %v315, 0
        %v354 = vsel %vm346, %v316, 0
        %v357 = vsel %vm346, %v317, 0
        %v360 = vsel %vm346, %v318, 0
        %v363 = vsel %vm346, %v319, 0
        %v366 = vsel %vm346, %v320, 0
        %v369 = vsel %vm346, %v321, 0
        %v372 = vsel %vm346, %v338, 0
        %v375 = vsel %vm346, %v339, 0
        %v378 = vsel %vm346, %v340, 0
        %v381 = vsel %vm346, %v341, 0
        %v384 = vsel %vm346, %v342, 0
        %v387 = vsel %vm346, %v343, 0
        %v390 = vsel %vm346, %v344, 0
        %v393 = vsel %vm346, %v345, 0
        %395 = vmatprep.subr.bf16.mxu0 0
        %396 = vmatpush1.bf16.xpose.msra.mxu0 %v372
        %397 = vmatprep.subr.bf16.mxu0 0
        %398 = vmatpush1.bf16.xpose.msra.mxu0 %v375
        %399 = vmatprep.subr.bf16.mxu0 0
        %400 = vmatpush1.bf16.xpose.msra.mxu0 %v378
        %401 = vmatprep.subr.bf16.mxu0 0
        %402 = vmatpush1.bf16.xpose.msra.mxu0 %v381
        %403 = vmatprep.subr.bf16.mxu0 0
        %404 = vmatpush1.bf16.xpose.msra.mxu0 %v384
        %405 = vmatprep.subr.bf16.mxu0 0
        %406 = vmatpush1.bf16.xpose.msra.mxu0 %v387
        %407 = vmatprep.subr.bf16.mxu0 0
        %408 = vmatpush1.bf16.xpose.msra.mxu0 %v390
        %409 = vmatprep.subr.bf16.mxu0 0
        %410 = vmatpush1.bf16.xpose.msra.mxu0 %v393
        %411 = vmatprep.subr.bf16.mxu0 0
        %412 = vmatpush1.bf16.xpose.msra.mxu0 0
        %413 = vmatprep.subr.bf16.mxu0 0
        %414 = vmatpush1.bf16.xpose.msra.mxu0 0
        %415 = vmatprep.subr.bf16.mxu0 0
        %416 = vmatpush1.bf16.xpose.msra.mxu0 0
        %417 = vmatprep.subr.bf16.mxu0 0
        %418 = vmatpush1.bf16.xpose.msra.mxu0 0
        %419 = vmatprep.subr.bf16.mxu0 0
        %420 = vmatpush1.bf16.xpose.msra.mxu0 0
        %421 = vmatprep.subr.bf16.mxu0 0
        %422 = vmatpush1.bf16.xpose.msra.mxu0 0
        %423 = vmatprep.subr.bf16.mxu0 0
        %424 = vmatpush1.bf16.xpose.msra.mxu0 0
        %425 = vmatprep.subr.bf16.mxu0 0
        %426 = vmatpush1.bf16.xpose.msra.mxu0 0
        %427 = vmatprep.mubr.bf16.mxu0 0
        %428 = vmatmul.mubr.bf16.gmra.mrb[0].mxu0 %v348
        %v429 = vpop.f32.mrb[0].mxu0
        %v430 = vadd.f32 0.0, %v429
        %v431 = vpop.f32.mrb[0].mxu0
        %v432 = vpop.f32.mrb[0].mxu0
        %v433 = vadd.f32 0.0, %v432
        %v434 = vpop.f32.mrb[0].mxu0
        %435 = vmatprep.mubr.bf16.mxu0 0
        %436 = vmatmul.mubr.bf16.gmra.mrb[0].mxu0 %v351
        %v437 = vpop.f32.mrb[0].mxu0
        %v438 = vadd.f32 0.0, %v437
        %v439 = vpop.f32.mrb[0].mxu0
        %v440 = vpop.f32.mrb[0].mxu0
        %v441 = vadd.f32 0.0, %v440
        %v442 = vpop.f32.mrb[0].mxu0
        %443 = vmatprep.mubr.bf16.mxu0 0
        %444 = vmatmul.mubr.bf16.gmra.mrb[0].mxu0 %v354
        %v445 = vpop.f32.mrb[0].mxu0
        %v446 = vadd.f32 0.0, %v445
        %v447 = vpop.f32.mrb[0].mxu0
        %v448 = vpop.f32.mrb[0].mxu0
        %v449 = vadd.f32 0.0, %v448
        %v450 = vpop.f32.mrb[0].mxu0
        %451 = vmatprep.mubr.bf16.mxu0 0
        %452 = vmatmul.mubr.bf16.gmra.mrb[0].mxu0 %v357
        %v453 = vpop.f32.mrb[0].mxu0
        %v454 = vadd.f32 0.0, %v453
        %v455 = vpop.f32.mrb[0].mxu0
        %v456 = vpop.f32.mrb[0].mxu0
        %v457 = vadd.f32 0.0, %v456
        %v458 = vpop.f32.mrb[0].mxu0
        %459 = vmatprep.mubr.bf16.mxu0 0
        %460 = vmatmul.mubr.bf16.gmra.mrb[0].mxu0 %v360
        %v461 = vpop.f32.mrb[0].mxu0
        %v462 = vadd.f32 0.0, %v461
        %v463 = vpop.f32.mrb[0].mxu0
        %v464 = vpop.f32.mrb[0].mxu0
        %v465 = vadd.f32 0.0, %v464
        %v466 = vpop.f32.mrb[0].mxu0
        %467 = vmatprep.mubr.bf16.mxu0 0
        %468 = vmatmul.mubr.bf16.gmra.mrb[0].mxu0 %v363
        %v469 = vpop.f32.mrb[0].mxu0
        %v470 = vadd.f32 0.0, %v469
        %v471 = vpop.f32.mrb[0].mxu0
        %v472 = vpop.f32.mrb[0].mxu0
        %v473 = vadd.f32 0.0, %v472
        %v474 = vpop.f32.mrb[0].mxu0
        %475 = vmatprep.mubr.bf16.mxu0 0
        %476 = vmatmul.mubr.bf16.gmra.mrb[0].mxu0 %v366
        %v477 = vpop.f32.mrb[0].mxu0
        %v478 = vadd.f32 0.0, %v477
        %v479 = vpop.f32.mrb[0].mxu0
        %v480 = vpop.f32.mrb[0].mxu0
        %v481 = vadd.f32 0.0, %v480
        %v482 = vpop.f32.mrb[0].mxu0
        %483 = vmatprep.mubr.bf16.mxu0 0
        %484 = vmatmul.mubr.bf16.gmra.mrb[0].mxu0 %v369
        %v485 = vpop.f32.mrb[0].mxu0
        %v486 = vadd.f32 0.0, %v485
        %v487 = vpop.f32.mrb[0].mxu0
        %v488 = vpop.f32.mrb[0].mxu0
        %v489 = vadd.f32 0.0, %v488
        %v490 = vpop.f32.mrb[0].mxu0
        %491 = vdwg.mxu0
        %492 = vmax.xlane.f32.xlu0 %v430
        %v493 = vpop.xlane.xlu0 %492
        %494 = vmax.xlane.f32.xlu0 %v433
        %v495 = vpop.xlane.xlu0 %494
        %496 = vmax.xlane.f32.xlu0 %v438
        %v497 = vpop.xlane.xlu0 %496
        %498 = vmax.xlane.f32.xlu0 %v441
        %v499 = vpop.xlane.xlu0 %498
        %500 = vmax.xlane.f32.xlu0 %v446
        %v501 = vpop.xlane.xlu0 %500
        %502 = vmax.xlane.f32.xlu0 %v449
        %v503 = vpop.xlane.xlu0 %502
        %504 = vmax.xlane.f32.xlu0 %v454
        %v505 = vpop.xlane.xlu0 %504
        %506 = vmax.xlane.f32.xlu0 %v457
        %v507 = vpop.xlane.xlu0 %506
        %508 = vmax.xlane.f32.xlu0 %v462
        %v509 = vpop.xlane.xlu0 %508
        %510 = vmax.xlane.f32.xlu0 %v465
        %v511 = vpop.xlane.xlu0 %510
        %512 = vmax.xlane.f32.xlu0 %v470
        %v513 = vpop.xlane.xlu0 %512
        %514 = vmax.xlane.f32.xlu0 %v473
        %v515 = vpop.xlane.xlu0 %514
        %516 = vmax.xlane.f32.xlu0 %v478
        %v517 = vpop.xlane.xlu0 %516
        %518 = vmax.xlane.f32.xlu0 %v481
        %v519 = vpop.xlane.xlu0 %518
        %520 = vmax.xlane.f32.xlu0 %v486
        %v521 = vpop.xlane.xlu0 %520
        %522 = vmax.xlane.f32.xlu0 %v489
        %v523 = vpop.xlane.xlu0 %522
        %v524 = vsub.f32 %v430, %v493
        %v525 = vsub.f32 %v433, %v495
        %v526 = vsub.f32 %v438, %v497
        %v527 = vsub.f32 %v441, %v499
        %v528 = vsub.f32 %v446, %v501
        %v529 = vsub.f32 %v449, %v503
        %v530 = vsub.f32 %v454, %v505
        %v531 = vsub.f32 %v457, %v507
        %v532 = vsub.f32 %v462, %v509
        %v533 = vsub.f32 %v465, %v511
        %v534 = vsub.f32 %v470, %v513
        %v535 = vsub.f32 %v473, %v515
        %v536 = vsub.f32 %v478, %v517
        %v537 = vsub.f32 %v481, %v519
        %v538 = vsub.f32 %v486, %v521
        %v539 = vsub.f32 %v489, %v523
        %v540 = vmul.f32 %v524, 1.442695
        %v541 = vpow.pop %v540
        %v542 = vmul.f32 %v525, 1.442695
        %v543 = vpow.pop %v542
        %v544 = vmul.f32 %v526, 1.442695
        %v545 = vpow.pop %v544
        %v546 = vmul.f32 %v527, 1.442695
        %v547 = vpow.pop %v546
        %v548 = vmul.f32 %v528, 1.442695
        %v549 = vpow.pop %v548
        %v550 = vmul.f32 %v529, 1.442695
        %v551 = vpow.pop %v550
        %v552 = vmul.f32 %v530, 1.442695
        %v553 = vpow.pop %v552
        %v554 = vmul.f32 %v531, 1.442695
        %v555 = vpow.pop %v554
        %v556 = vmul.f32 %v532, 1.442695
        %v557 = vpow.pop %v556
        %v558 = vmul.f32 %v533, 1.442695
        %v559 = vpow.pop %v558
        %v560 = vmul.f32 %v534, 1.442695
        %v561 = vpow.pop %v560
        %v562 = vmul.f32 %v535, 1.442695
        %v563 = vpow.pop %v562
        %v564 = vmul.f32 %v536, 1.442695
        %v565 = vpow.pop %v564
        %v566 = vmul.f32 %v537, 1.442695
        %v567 = vpow.pop %v566
        %v568 = vmul.f32 %v538, 1.442695
        %v569 = vpow.pop %v568
        %v570 = vmul.f32 %v539, 1.442695
        %v571 = vpow.pop %v570
        %572 = vadd.xlane.f32.xlu0 %v541
        %v573 = vpop.xlane.xlu0 %572
        %574 = vadd.xlane.f32.xlu0 %v543
        %v575 = vpop.xlane.xlu0 %574
        %576 = vadd.xlane.f32.xlu0 %v545
        %v577 = vpop.xlane.xlu0 %576
        %578 = vadd.xlane.f32.xlu0 %v547
        %v579 = vpop.xlane.xlu0 %578
        %580 = vadd.xlane.f32.xlu0 %v549
        %v581 = vpop.xlane.xlu0 %580
        %582 = vadd.xlane.f32.xlu0 %v551
        %v583 = vpop.xlane.xlu0 %582
        %584 = vadd.xlane.f32.xlu0 %v553
        %v585 = vpop.xlane.xlu0 %584
        %586 = vadd.xlane.f32.xlu0 %v555
        %v587 = vpop.xlane.xlu0 %586
        %588 = vadd.xlane.f32.xlu0 %v557
        %v589 = vpop.xlane.xlu0 %588
        %590 = vadd.xlane.f32.xlu0 %v559
        %v591 = vpop.xlane.xlu0 %590
        %592 = vadd.xlane.f32.xlu0 %v561
        %v593 = vpop.xlane.xlu0 %592
        %594 = vadd.xlane.f32.xlu0 %v563
        %v595 = vpop.xlane.xlu0 %594
        %596 = vadd.xlane.f32.xlu0 %v565
        %v597 = vpop.xlane.xlu0 %596
        %598 = vadd.xlane.f32.xlu0 %v567
        %v599 = vpop.xlane.xlu0 %598
        %600 = vadd.xlane.f32.xlu0 %v569
        %v601 = vpop.xlane.xlu0 %600
        %602 = vadd.xlane.f32.xlu0 %v571
        %v603 = vpop.xlane.xlu0 %602
        %v604 = vrcp.pop %v573
        %v605 = vrcp.pop %v575
        %v606 = vrcp.pop %v577
        %v607 = vrcp.pop %v579
        %v608 = vrcp.pop %v581
        %v609 = vrcp.pop %v583
        %v610 = vrcp.pop %v585
        %v611 = vrcp.pop %v587
        %v612 = vrcp.pop %v589
        %v613 = vrcp.pop %v591
        %v614 = vrcp.pop %v593
        %v615 = vrcp.pop %v595
        %v616 = vrcp.pop %v597
        %v617 = vrcp.pop %v599
        %v618 = vrcp.pop %v601
        %v619 = vrcp.pop %v603
        %v620 = vmul.f32 %v541, %v604
        %v621 = vmul.f32 %v543, %v605
        %v622 = vmul.f32 %v545, %v606
        %v623 = vmul.f32 %v547, %v607
        %v624 = vmul.f32 %v549, %v608
        %v625 = vmul.f32 %v551, %v609
        %v626 = vmul.f32 %v553, %v610
        %v627 = vmul.f32 %v555, %v611
        %v628 = vmul.f32 %v557, %v612
        %v629 = vmul.f32 %v559, %v613
        %v630 = vmul.f32 %v561, %v614
        %v631 = vmul.f32 %v563, %v615
        %v632 = vmul.f32 %v565, %v616
        %v633 = vmul.f32 %v567, %v617
        %v634 = vmul.f32 %v569, %v618
        %v635 = vmul.f32 %v571, %v619
        %v636 = vpack.c.bf16 %v621, %v620
        %v637 = vpack.c.bf16 %v623, %v622
        %v638 = vpack.c.bf16 %v625, %v624
        %v639 = vpack.c.bf16 %v627, %v626
        %v640 = vpack.c.bf16 %v629, %v628
        %v641 = vpack.c.bf16 %v631, %v630
        %v642 = vpack.c.bf16 %v633, %v632
        %v643 = vpack.c.bf16 %v635, %v634
        %v644 = vld [vmem:[%s278] sm:$0xff]
        %v645 = vld [vmem:[%s278 + $0x8] sm:$0xff]
        %v646 = vld [vmem:[%s278 + $0x10] sm:$0xff]
        %v647 = vld [vmem:[%s278 + $0x18] sm:$0xff]
        %v648 = vld [vmem:[%s278 + $0x20] sm:$0xff]
        %v649 = vld [vmem:[%s278 + $0x28] sm:$0xff]
        %v650 = vld [vmem:[%s278 + $0x30] sm:$0xff]
        %v651 = vld [vmem:[%s278 + $0x38] sm:$0xff]
        %v652 = vld [vmem:[%s278 + $0x40] sm:$0xff]
        %v653 = vld [vmem:[%s278 + $0x48] sm:$0xff]
        %v654 = vld [vmem:[%s278 + $0x50] sm:$0xff]
        %v655 = vld [vmem:[%s278 + $0x58] sm:$0xff]
        %v656 = vld [vmem:[%s278 + $0x60] sm:$0xff]
        %v657 = vld [vmem:[%s278 + $0x68] sm:$0xff]
        %v658 = vld [vmem:[%s278 + $0x70] sm:$0xff]
        %v659 = vld [vmem:[%s278 + $0x78] sm:$0xff]
        %v660 = vpack.c.bf16 %v645, %v644
        %v661 = vpack.c.bf16 %v647, %v646
        %v662 = vpack.c.bf16 %v649, %v648
        %v663 = vpack.c.bf16 %v651, %v650
        %v664 = vpack.c.bf16 %v653, %v652
        %v665 = vpack.c.bf16 %v655, %v654
        %v666 = vpack.c.bf16 %v657, %v656
        %v667 = vpack.c.bf16 %v659, %v658
        %668 = vmatprep.subr.bf16.mxu0 0
        %669 = vmatpush1.bf16.msra.mxu0 %v660
        %670 = vmatprep.subr.bf16.mxu0 0
        %671 = vmatpush1.bf16.msra.mxu0 %v661
        %672 = vmatprep.subr.bf16.mxu0 0
        %673 = vmatpush1.bf16.msra.mxu0 %v662
        %674 = vmatprep.subr.bf16.mxu0 0
        %675 = vmatpush1.bf16.msra.mxu0 %v663
        %676 = vmatprep.subr.bf16.mxu0 0
        %677 = vmatpush1.bf16.msra.mxu0 %v664
        %678 = vmatprep.subr.bf16.mxu0 0
        %679 = vmatpush1.bf16.msra.mxu0 %v665
        %680 = vmatprep.subr.bf16.mxu0 0
        %681 = vmatpush1.bf16.msra.mxu0 %v666
        %682 = vmatprep.subr.bf16.mxu0 0
        %683 = vmatpush1.bf16.msra.mxu0 %v667
        %684 = vmatprep.subr.bf16.mxu0 0
        %685 = vmatpush1.bf16.msra.mxu0 0
        %686 = vmatprep.subr.bf16.mxu0 0
        %687 = vmatpush1.bf16.msra.mxu0 0
        %688 = vmatprep.subr.bf16.mxu0 0
        %689 = vmatpush1.bf16.msra.mxu0 0
        %690 = vmatprep.subr.bf16.mxu0 0
        %691 = vmatpush1.bf16.msra.mxu0 0
        %692 = vmatprep.subr.bf16.mxu0 0
        %693 = vmatpush1.bf16.msra.mxu0 0
        %694 = vmatprep.subr.bf16.mxu0 0
        %695 = vmatpush1.bf16.msra.mxu0 0
        %696 = vmatprep.subr.bf16.mxu0 0
        %697 = vmatpush1.bf16.msra.mxu0 0
        %698 = vmatprep.subr.bf16.mxu0 0
        %699 = vmatpush1.bf16.msra.mxu0 0
        %700 = vmatprep.mubr.bf16.mxu0 0
        %701 = vmatmul.mubr.bf16.gmra.mrb[0].mxu0 %v636
        %v702 = vpop.f32.mrb[0].mxu0
        %v703 = vadd.f32 0.0, %v702
        %v704 = vpop.f32.mrb[0].mxu0
        %v705 = vpop.f32.mrb[0].mxu0
        %v706 = vadd.f32 0.0, %v705
        %v707 = vpop.f32.mrb[0].mxu0
        %708 = vmatprep.mubr.bf16.mxu0 0
        %709 = vmatmul.mubr.bf16.gmra.mrb[0].mxu0 %v637
        %v710 = vpop.f32.mrb[0].mxu0
        %v711 = vadd.f32 0.0, %v710
        %v712 = vpop.f32.mrb[0].mxu0
        %v713 = vpop.f32.mrb[0].mxu0
        %v714 = vadd.f32 0.0, %v713
        %v715 = vpop.f32.mrb[0].mxu0
        %716 = vmatprep.mubr.bf16.mxu0 0
        %717 = vmatmul.mubr.bf16.gmra.mrb[0].mxu0 %v638
        %v718 = vpop.f32.mrb[0].mxu0
        %v719 = vadd.f32 0.0, %v718
        %v720 = vpop.f32.mrb[0].mxu0
        %v721 = vpop.f32.mrb[0].mxu0
        %v722 = vadd.f32 0.0, %v721
        %v723 = vpop.f32.mrb[0].mxu0
        %724 = vmatprep.mubr.bf16.mxu0 0
        %725 = vmatmul.mubr.bf16.gmra.mrb[0].mxu0 %v639
        %v726 = vpop.f32.mrb[0].mxu0
        %v727 = vadd.f32 0.0, %v726
        %v728 = vpop.f32.mrb[0].mxu0
        %v729 = vpop.f32.mrb[0].mxu0
        %v730 = vadd.f32 0.0, %v729
        %v731 = vpop.f32.mrb[0].mxu0
        %732 = vmatprep.mubr.bf16.mxu0 0
        %733 = vmatmul.mubr.bf16.gmra.mrb[0].mxu0 %v640
        %v734 = vpop.f32.mrb[0].mxu0
        %v735 = vadd.f32 0.0, %v734
        %v736 = vpop.f32.mrb[0].mxu0
        %v737 = vpop.f32.mrb[0].mxu0
        %v738 = vadd.f32 0.0, %v737
        %v739 = vpop.f32.mrb[0].mxu0
        %740 = vmatprep.mubr.bf16.mxu0 0
        %741 = vmatmul.mubr.bf16.gmra.mrb[0].mxu0 %v641
        %v742 = vpop.f32.mrb[0].mxu0
        %v743 = vadd.f32 0.0, %v742
        %v744 = vpop.f32.mrb[0].mxu0
        %v745 = vpop.f32.mrb[0].mxu0
        %v746 = vadd.f32 0.0, %v745
        %v747 = vpop.f32.mrb[0].mxu0
        %748 = vmatprep.mubr.bf16.mxu0 0
        %749 = vmatmul.mubr.bf16.gmra.mrb[0].mxu0 %v642
        %v750 = vpop.f32.mrb[0].mxu0
        %v751 = vadd.f32 0.0, %v750
        %v752 = vpop.f32.mrb[0].mxu0
        %v753 = vpop.f32.mrb[0].mxu0
        %v754 = vadd.f32 0.0, %v753
        %v755 = vpop.f32.mrb[0].mxu0
        %756 = vmatprep.mubr.bf16.mxu0 0
        %757 = vmatmul.mubr.bf16.gmra.mrb[0].mxu0 %v643
        %v758 = vpop.f32.mrb[0].mxu0
        %v759 = vadd.f32 0.0, %v758
        %v760 = vpop.f32.mrb[0].mxu0
        %v761 = vpop.f32.mrb[0].mxu0
        %v762 = vadd.f32 0.0, %v761
        %v763 = vpop.f32.mrb[0].mxu0
        %764 = vdwg.mxu0
        %765 = vst [vmem:[%s258] sm:$0xff] %v620
        %766 = vst [vmem:[%s258 + $0x8] sm:$0xff] %v621
        %767 = vst [vmem:[%s258 + $0x10] sm:$0xff] %v622
        %768 = vst [vmem:[%s258 + $0x18] sm:$0xff] %v623
        %769 = vst [vmem:[%s258 + $0x20] sm:$0xff] %v624
        %770 = vst [vmem:[%s258 + $0x28] sm:$0xff] %v625
        %771 = vst [vmem:[%s258 + $0x30] sm:$0xff] %v626
        %772 = vst [vmem:[%s258 + $0x38] sm:$0xff] %v627
        %773 = vst [vmem:[%s258 + $0x40] sm:$0xff] %v628
        %774 = vst [vmem:[%s258 + $0x48] sm:$0xff] %v629
        %775 = vst [vmem:[%s258 + $0x50] sm:$0xff] %v630
        %776 = vst [vmem:[%s258 + $0x58] sm:$0xff] %v631
        %777 = vst [vmem:[%s258 + $0x60] sm:$0xff] %v632
        %778 = vst [vmem:[%s258 + $0x68] sm:$0xff] %v633
        %779 = vst [vmem:[%s258 + $0x70] sm:$0xff] %v634
        %780 = vst [vmem:[%s258 + $0x78] sm:$0xff] %v635
        %781 = vst [vmem:[%s251] sm:$0xff] %v703
        %782 = vst [vmem:[%s251 + $0x8] sm:$0xff] %v706
        %783 = vst [vmem:[%s251 + $0x10] sm:$0xff] %v711
        %784 = vst [vmem:[%s251 + $0x18] sm:$0xff] %v714
        %785 = vst [vmem:[%s251 + $0x20] sm:$0xff] %v719
        %786 = vst [vmem:[%s251 + $0x28] sm:$0xff] %v722
        %787 = vst [vmem:[%s251 + $0x30] sm:$0xff] %v727
        %788 = vst [vmem:[%s251 + $0x38] sm:$0xff] %v730
        %789 = vst [vmem:[%s251 + $0x40] sm:$0xff] %v735
        %790 = vst [vmem:[%s251 + $0x48] sm:$0xff] %v738
        %791 = vst [vmem:[%s251 + $0x50] sm:$0xff] %v743
        %792 = vst [vmem:[%s251 + $0x58] sm:$0xff] %v746
        %793 = vst [vmem:[%s251 + $0x60] sm:$0xff] %v751
        %794 = vst [vmem:[%s251 + $0x68] sm:$0xff] %v754
        %795 = vst [vmem:[%s251 + $0x70] sm:$0xff] %v759
        %796 = vst [vmem:[%s251 + $0x78] sm:$0xff] %v762
        %s797 = sand.u32 %s124, 1
        %s798 = scalar_lea.sflag [#allocation3], %s797
        %s799 = sand.u32 %s124, 1
        %s800 = smul.addr %s799, 128
        %s801 = scalar_lea.vmem [#allocation2], %s800
        %s802 = sand.u32 %s152, 1
        %s803 = scalar_lea.sflag [#allocation5], %s802
        %s804 = sand.u32 %s152, 1
        %s805 = smul.addr %s804, 128
        %s806 = scalar_lea.vmem [#allocation4], %s805
        // Predicated region
        $region33: #{tpu_custom_call.1} parent=31 // pred_check
          %p807 = pneg %p134
        $region34: #{tpu_custom_call.1} parent=31 // pred_check_branch
          %809 = sbr.rel (%p807) target = $region36
        $region35: #{tpu_custom_call.1} parent=31 // pred_region
          %s810 = smul.u32 16, %s27
          %s812 = ssub.s32 2048, 2048
          %813 = vsyncadd %s798, %s812
          %s814 = smul.addr %s26, 32
          %s815 = sadd.s32 %s810, %s814
          %s816 = smul.addr %s815, 128
          %s817 = scalar_lea.hbm %s3, %s816
          %s818 = sshll.u32 %s801, 4
          %s819 = int_to_ptr.vmem [resolvable:$true] %s818
          %824 = dma.vmem_to_hbm [thread:$0]  %s819, 2048, %s817, %s798, 128, 128, 8
        $region36: #{tpu_custom_call.1} parent=31 // pred_fallthru
          _
        // Predicated region
        $region37: #{tpu_custom_call.1} parent=31 // pred_check
          %p825 = pneg %p162
        $region38: #{tpu_custom_call.1} parent=31 // pred_check_branch
          %827 = sbr.rel (%p825) target = $region40
        $region39: #{tpu_custom_call.1} parent=31 // pred_region
          %s828 = smul.u32 16, %s27
          %s830 = ssub.s32 2048, 2048
          %831 = vsyncadd %s803, %s830
          %s832 = smul.addr %s26, 32
          %s833 = sadd.s32 %s828, %s832
          %s834 = smul.addr %s833, 128
          %s835 = scalar_lea.hbm %s4, %s834
          %s836 = sshll.u32 %s806, 4
          %s837 = int_to_ptr.vmem [resolvable:$true] %s836
          %842 = dma.vmem_to_hbm [thread:$0]  %s837, 2048, %s835, %s803, 128, 128, 8
        $region40: #{tpu_custom_call.1} parent=31 // pred_fallthru
          _
      $region32: #{tpu_custom_call.1} parent=5 // pred_fallthru
        _
      %p843 = scmp.le.s32.totalorder 2, %s17
      // Predicated region
      $region41: #{tpu_custom_call.1} parent=5 // pred_check
        %p844 = pneg %p843
      $region42: #{tpu_custom_call.1} parent=5 // pred_check_branch
        %846 = sbr.rel (%p844) target = $region44
      $region43: #{tpu_custom_call.1} parent=5 // pred_region
        %s847 = ssub.s32 %s17, 2
        // Predicated region
        $region45: #{tpu_custom_call.1} parent=43 // pred_check
          %p848 = pneg %p140
        $region46: #{tpu_custom_call.1} parent=43 // pred_check_branch
          %850 = sbr.rel (%p848) target = $region48
        $region47: #{tpu_custom_call.1} parent=43 // pred_region
          %s851 = sand.u32 %s125, 1
          %s852 = scalar_lea.sflag [#allocation3], %s851
          %s853 = sand.u32 %s125, 1
          %s854 = smul.addr %s853, 128
          %s855 = scalar_lea.vmem [#allocation2], %s854
          %856 = dma.done %s852, 2048
        $region48: #{tpu_custom_call.1} parent=43 // pred_fallthru
          _
        // Predicated region
        $region49: #{tpu_custom_call.1} parent=43 // pred_check
          %p857 = pneg %p168
        $region50: #{tpu_custom_call.1} parent=43 // pred_check_branch
          %859 = sbr.rel (%p857) target = $region52
        $region51: #{tpu_custom_call.1} parent=43 // pred_region
          %s860 = sand.u32 %s153, 1
          %s861 = scalar_lea.sflag [#allocation5], %s860
          %s862 = sand.u32 %s153, 1
          %s863 = smul.addr %s862, 128
          %s864 = scalar_lea.vmem [#allocation4], %s863
          %865 = dma.done %s861, 2048
        $region52: #{tpu_custom_call.1} parent=43 // pred_fallthru
          _
      $region44: #{tpu_custom_call.1} parent=5 // pred_fallthru
        _
    $region6: #{tpu_custom_call.1} parent=1 // loop_footer
      %s21 = sadd.s32 1, %s17
    $region7: #{tpu_custom_call.1} parent=1 // loop_footer_branch
      %16 = sbr.rel target = $region3
    $region8: #{tpu_custom_call.1} parent=1 // loop_exit
      _
    %866 = vsyncpa [#allocation3], 1
    %s867 = scalar_lea.sflag [#allocation3], 1
    %868 = vsyncpa %s867, 1
    %869 = vsyncpa [#allocation5], 1
    %s870 = scalar_lea.sflag [#allocation5], 1
    %871 = vsyncpa %s870, 1

</llo_original>
